<compile_context>
chip_gen: v6e
topology: v6e:2x2x1
jax: 0.10.0
libtpu: 0.0.40
codegen_flags: <defaults>
</compile_context>

<pallas_src>
import functools
import math

import jax
import jax.numpy as jnp
from jax.experimental import pallas as pl
from jax.experimental.pallas import tpu as pltpu

EPS = 1e-5
VMEM_LIMIT = 32 * 1024 * 1024   # safe on v5e/v6e/v7x; actual usage here is ~2 MB


# ----------------------------------------------------------------------------------
# helpers used inside kernels
# ----------------------------------------------------------------------------------
def _layernorm(x, g, b):
    mu = jnp.mean(x, axis=-1, keepdims=True)
    var = jnp.mean((x - mu) ** 2, axis=-1, keepdims=True)
    return (x - mu) * jax.lax.rsqrt(var + EPS) * g + b


# ----------------------------------------------------------------------------------
# kernel 1: edge_in_lin + per-(layer, head) edge-bias contraction
# ----------------------------------------------------------------------------------
def edge_bias_kernel(ea_ref, eiw_ref, eib_ref, eig_ref, eibt_ref, evt_ref, out_ref):
    """edge_in_lin (Linear + LayerNorm) then contract against all layers'/heads'
       edge vectors in one MXU matmul: [E, De] @ [De, L*H] -> [E, L*H]."""
    ep = jnp.dot(ea_ref[...].astype(jnp.bfloat16), eiw_ref[...],
                 preferred_element_type=jnp.float32) + eib_ref[...]
    ep = _layernorm(ep, eig_ref[...], eibt_ref[...])
    out_ref[...] = jnp.dot(ep.astype(jnp.bfloat16), evt_ref[...],
                           preferred_element_type=jnp.float32)


# ----------------------------------------------------------------------------------
# kernel 2: input prologue + all encoder layers + output epilogue, grid over layers
# ----------------------------------------------------------------------------------
def fused_model_kernel(n_heads,
                       # layer-invariant (prologue) inputs
                       nf_ref, aw_ref, ab_ref,
                       niw_ref, nib_ref, nig_ref, nibt_ref, cent_ref,
                       # per-layer inputs
                       ebsp_ref,
                       ln1g_ref, ln1b_ref,
                       wqkv_ref, bqkv_ref, wo_ref, bo_ref,
                       ln2g_ref, ln2b_ref,
                       w1_ref, b1_ref, w2_ref, b2_ref,
                       # layer-invariant (epilogue) inputs
                       olng_ref, olnb_ref, ow_ref, ob_ref,
                       bng_ref, bnb_ref, pw_ref, pb_ref,
                       # output + scratch
                       out_ref, x_scr):
    l = pl.program_id(0)

    # ---- prologue (layer 0 only): SimpleAttention + node_in_lin + centrality -----
    @pl.when(l == 0)
    def _():
        # TODO(synk): SimpleAttentionLayer source not provided; assumed
        #             scores = softmax_over_nodes(Linear(enh -> 1)), x <- x * scores.
        nf = nf_ref[...]                                          # [N, enh] f32
        # 1-column "matmul" done as a lane reduce (avoids a 1/128-lane MXU result).
        sc = jnp.sum(nf * aw_ref[...], axis=-1, keepdims=True) + ab_ref[...]
        sc = sc - jnp.max(sc, axis=0, keepdims=True)
        sc = jnp.exp(sc)
        sc = sc / jnp.sum(sc, axis=0, keepdims=True)
        nf = nf * sc

        h = jnp.dot(nf.astype(jnp.bfloat16), niw_ref[...],
                    preferred_element_type=jnp.float32) + nib_ref[...]
        h = _layernorm(h, nig_ref[...], nibt_ref[...])
        x_scr[...] = h + cent_ref[...]                            # centrality encoding

    # ---- one GraphormerEncoderLayer per grid step ---------------------------------
    x = x_scr[...]                                                # [N, D] f32 carry
    N, D = x.shape
    H = n_heads
    dh = D // H
    scale = 1.0 / math.sqrt(dh)

    h = _layernorm(x, ln1g_ref[...], ln1b_ref[...])
    # Single lane-dense QKV projection: [N,D] @ [D,3D]  (full MXU feed).
    qkv = jnp.dot(h.astype(jnp.bfloat16), wqkv_ref[...],
                  preferred_element_type=jnp.float32) + bqkv_ref[...]
    q = qkv[:, :D] * scale                                        # scale folded into q
    k = qkv[:, D:2 * D]
    v = qkv[:, 2 * D:]

    # Per-head attention on static lane slices; score/pv matmuls are inherently
    # dh-sized, but projections stay full-width.
    o_heads = []
    for hh in range(H):
        sl = slice(hh * dh, (hh + 1) * dh)
        qh = q[:, sl].astype(jnp.bfloat16)
        kh = k[:, sl].astype(jnp.bfloat16)
        vh = v[:, sl].astype(jnp.bfloat16)
        s = jnp.dot(qh, kh.T, preferred_element_type=jnp.float32)     # [N, N]
        s = s + ebsp_ref[hh].astype(jnp.float32)                      # spatial+edge bias
        s = s - jnp.max(s, axis=-1, keepdims=True)
        p = jnp.exp(s)
        p = p * pl.reciprocal(jnp.sum(p, axis=-1, keepdims=True), approx=True)
        o_heads.append(jnp.dot(p.astype(jnp.bfloat16), vh,
                               preferred_element_type=jnp.float32))   # [N, dh]
    o_flat = jnp.concatenate(o_heads, axis=-1)                        # [N, D]

    # Single full-K output projection: concat(heads) @ Wo.
    attn = jnp.dot(o_flat.astype(jnp.bfloat16), wo_ref[...],
                   preferred_element_type=jnp.float32) + bo_ref[...]
    x1 = x + attn

    # TODO(synk): exact FFN of GraphormerEncoderLayer not in provided source; assumed
    #             Linear(D, ff_dim) -> ReLU -> Linear(ff_dim, D) with pre-LayerNorm.
    h2 = _layernorm(x1, ln2g_ref[...], ln2b_ref[...])
    ff = jnp.dot(h2.astype(jnp.bfloat16), w1_ref[...],
                 preferred_element_type=jnp.float32) + b1_ref[...]
    ff = jnp.maximum(ff, 0.0)
    ff = jnp.dot(ff.astype(jnp.bfloat16), w2_ref[...],
                 preferred_element_type=jnp.float32) + b2_ref[...]

    x_new = x1 + ff
    x_scr[...] = x_new

    # ---- epilogue (last layer only): node_out_lin + BatchNorm1d + mean-pool -------
    @pl.when(l == pl.num_programs(0) - 1)
    def _():
        ho = _layernorm(x_new, olng_ref[...], olnb_ref[...])
        y = jnp.dot(ho.astype(jnp.bfloat16), ow_ref[...],
                    preferred_element_type=jnp.float32) + ob_ref[...]
        # BatchNorm1d, training-mode statistics over the node (batch) axis.
        # TODO(synk): no running-mean/var tracking (eval-mode BatchNorm would differ).
        mu = jnp.mean(y, axis=0, keepdims=True)
        var = jnp.mean((y - mu) ** 2, axis=0, keepdims=True)
        y = (y - mu) * jax.lax.rsqrt(var + EPS) * bng_ref[...] + bnb_ref[...]
        # TODO(synk): MeanPooling source not provided; assumed global mean pool + Linear.
        pooled = jnp.mean(y, axis=0, keepdims=True)                   # [1, D]
        out_ref[...] = jnp.dot(pooled.astype(jnp.bfloat16), pw_ref[...],
                               preferred_element_type=jnp.float32) + pb_ref[...]


# ----------------------------------------------------------------------------------
# parameter init (deterministic, kaiming-uniform like torch init in _init_parameters)
# ----------------------------------------------------------------------------------
def _kaiming(key, shape):
    fan_in = shape[-2] if len(shape) > 1 else shape[0]
    bound = math.sqrt(6.0 / fan_in)
    return jax.random.uniform(key, shape, jnp.float32, -bound, bound)


def init_params(key, cfg):
    D, H, De = cfg['node_dim'], cfg['n_heads'], cfg['edge_dim']
    L, F = cfg['num_layers'], cfg['ff_dim']
    enh = cfg['input_node_dim'] - 4 + D // 8
    bf = jnp.bfloat16
    ks = iter(jax.random.split(key, 32))
    p = {}
    p['vis_w'] = _kaiming(next(ks), (4, D // 8));          p['vis_b'] = jnp.zeros((1, D // 8))
    p['attn_w'] = _kaiming(next(ks), (enh, 1)).reshape(1, enh)
    p['attn_b'] = jnp.zeros((1, 1))
    p['node_in_w'] = _kaiming(next(ks), (enh, D)).astype(bf)
    p['node_in_b'] = jnp.zeros((1, D))
    p['node_in_ln_g'] = jnp.ones((1, D));                  p['node_in_ln_b'] = jnp.zeros((1, D))
    p['edge_in_w'] = _kaiming(next(ks), (cfg['input_edge_dim'], De)).astype(bf)
    p['edge_in_b'] = jnp.zeros((1, De))
    p['edge_in_ln_g'] = jnp.ones((1, De));                 p['edge_in_ln_b'] = jnp.zeros((1, De))
    p['z_in'] = jax.random.normal(next(ks), (cfg['max_in_degree'], D), jnp.float32)
    p['z_out'] = jax.random.normal(next(ks), (cfg['max_out_degree'], D), jnp.float32)
    p['spatial_b'] = jax.random.normal(next(ks), (cfg['max_path_distance'],), jnp.float32)

    # ---- encoder layer weights, stacked along a leading L axis ---------------------
    # Q|K|V concatenated on the output axis (heads occupy consecutive dh-lane slices).
    p['wqkv'] = _kaiming(next(ks), (L, D, 3 * D)).astype(bf)              # [L, D, 3D]
    p['bqkv'] = jnp.zeros((L, 1, 3 * D))
    p['wo'] = _kaiming(next(ks), (L, D, D)).astype(bf)                     # [L, D, D]
    p['bo'] = jnp.zeros((L, 1, D))
    p['ln1_g'] = jnp.ones((L, 1, D)); p['ln1_b'] = jnp.zeros((L, 1, D))
    p['ln2_g'] = jnp.ones((L, 1, D)); p['ln2_b'] = jnp.zeros((L, 1, D))
    p['w1'] = _kaiming(next(ks), (L, D, F)).astype(bf); p['b1'] = jnp.zeros((L, 1, F))
    p['w2'] = _kaiming(next(ks), (L, F, D)).astype(bf); p['b2'] = jnp.zeros((L, 1, D))
    evec = jax.random.normal(next(ks), (L, H, De), jnp.float32)
    p['evec_t'] = evec.reshape(L * H, De).T.astype(bf)                     # [De, L*H]

    p['out_ln_g'] = jnp.ones((1, D));                      p['out_ln_b'] = jnp.zeros((1, D))
    p['out_w'] = _kaiming(next(ks), (D, D)).astype(bf);    p['out_b'] = jnp.zeros((1, D))
    p['bn_g'] = jnp.ones((1, D));                          p['bn_b'] = jnp.zeros((1, D))
    p['pool_w'] = _kaiming(next(ks), (D, cfg['output_dim'])).astype(bf)
    p['pool_b'] = jnp.zeros((1, cfg['output_dim']))
    return p


# ----------------------------------------------------------------------------------
# forward pass
# ----------------------------------------------------------------------------------
def graphormer_forward(params, x, edge_index, edge_attr, cfg):
    N = x.shape[0]
    E = edge_attr.shape[0]
    D, De, H = cfg['node_dim'], cfg['edge_dim'], cfg['n_heads']
    L, F = cfg['num_layers'], cfg['ff_dim']
    Dout = cfg['output_dim']
    enh = cfg['input_node_dim'] - 4 + D // 8

    # ---- glue: visibility embedding + feature concat (layout plumbing) ----
    vis = x[:, 12:16] @ params['vis_w'] + params['vis_b']
    node_features = jnp.concatenate([x[:, :12], vis, x[:, 16:]], axis=1)   # [N, enh]

    # ---- glue: graph preprocessing (degrees, path existence) ----
    src, dst = edge_index[0], edge_index[1]
    in_deg = jnp.minimum(jnp.zeros((N,), jnp.int32).at[dst].add(1),
                         cfg['max_in_degree'] - 1)
    out_deg = jnp.minimum(jnp.zeros((N,), jnp.int32).at[src].add(1),
                          cfg['max_out_degree'] - 1)
    cent = params['z_in'][in_deg] + params['z_out'][out_deg]               # [N, D]

    # reachability (shortest-path existence); with max_path_distance=1 spatial bias
    # is b[0] for every reachable (incl. self) pair.
    # TODO(synk): networkx shortest_path_distance replaced by dense transitive closure.
    adj = jnp.zeros((N, N), jnp.float32).at[src, dst].set(1.0)
    reach = jnp.minimum(adj + jnp.eye(N, dtype=jnp.float32), 1.0)
    for _ in range(int(math.ceil(math.log2(max(N, 2)))) + 1):
        reach = jnp.minimum(reach @ reach, 1.0)
    bsp = reach * params['spatial_b'][0]                                   # [N, N]

    # ---- kernel 1: edge_in_lin + per-(layer,head) edge-bias contraction ----
    eb_edges = pl.pallas_call(
        edge_bias_kernel,
        out_shape=jax.ShapeDtypeStruct((E, L * H), jnp.float32),
        in_specs=[pl.BlockSpec(memory_space=pltpu.MemorySpace.VMEM)] * 6,
        out_specs=pl.BlockSpec(memory_space=pltpu.MemorySpace.VMEM),
        compiler_params=pltpu.CompilerParams(vmem_limit_bytes=VMEM_LIMIT),
    )(edge_attr.astype(jnp.float32), params['edge_in_w'], params['edge_in_b'],
      params['edge_in_ln_g'], params['edge_in_ln_b'], params['evec_t'])

    # ---- glue: scatter per-edge bias to dense [L, H, N, N] (direct edges only),
    #      fold the spatial bias in once, ship bf16 (halves DMA/VMEM per layer) ----
    # TODO(synk): multi-hop edge-path encoding approximated by direct-edge encoding;
    #             duplicate (src,dst) pairs keep the last edge's bias (set, not add).
    eb = jnp.zeros((L * H, N, N), jnp.float32).at[:, src, dst].set(eb_edges.T)
    eb_sp = (eb.reshape(L, H, N, N) + bsp[None, None, :, :]).astype(jnp.bfloat16)

    # ---- kernel 2: prologue + all encoder layers + epilogue, grid over layers ----
    const2 = lambda l: (0, 0)
    per_l3 = lambda l: (l, 0, 0)
    per_l4 = lambda l: (l, 0, 0, 0)
    in_specs = [
        # layer-invariant (prologue) inputs, resident in VMEM
        pl.BlockSpec((N, enh), const2),                       # node_features
        pl.BlockSpec((1, enh), const2),                       # attn_w
        pl.BlockSpec((1, 1), const2),                         # attn_b
        pl.BlockSpec((enh, D), const2),                       # node_in_w
        pl.BlockSpec((1, D), const2),                         # node_in_b
        pl.BlockSpec((1, D), const2),                         # node_in_ln_g
        pl.BlockSpec((1, D), const2),                         # node_in_ln_b
        pl.BlockSpec((N, D), const2),                         # centrality
        # per-layer inputs
        pl.BlockSpec((None, H, N, N), per_l4),                # spatial+edge bias (bf16)
        pl.BlockSpec((None, 1, D), per_l3),                   # ln1_g
        pl.BlockSpec((None, 1, D), per_l3),                   # ln1_b
        pl.BlockSpec((None, D, 3 * D), per_l3),               # wqkv
        pl.BlockSpec((None, 1, 3 * D), per_l3),               # bqkv
        pl.BlockSpec((None, D, D), per_l3),                   # wo
        pl.BlockSpec((None, 1, D), per_l3),                   # bo
        pl.BlockSpec((None, 1, D), per_l3),                   # ln2_g
        pl.BlockSpec((None, 1, D), per_l3),                   # ln2_b
        pl.BlockSpec((None, D, F), per_l3),                   # w1
        pl.BlockSpec((None, 1, F), per_l3),                   # b1
        pl.BlockSpec((None, F, D), per_l3),                   # w2
        pl.BlockSpec((None, 1, D), per_l3),                   # b2
        # layer-invariant (epilogue) inputs
        pl.BlockSpec((1, D), const2),                         # out_ln_g
        pl.BlockSpec((1, D), const2),                         # out_ln_b
        pl.BlockSpec((D, D), const2),                         # out_w
        pl.BlockSpec((1, D), const2),                         # out_b
        pl.BlockSpec((1, D), const2),                         # bn_g
        pl.BlockSpec((1, D), const2),                         # bn_b
        pl.BlockSpec((D, Dout), const2),                      # pool_w
        pl.BlockSpec((1, Dout), const2),                      # pool_b
    ]
    out = pl.pallas_call(
        functools.partial(fused_model_kernel, H),
        out_shape=jax.ShapeDtypeStruct((1, Dout), jnp.float32),
        grid=(L,),
        in_specs=in_specs,
        out_specs=pl.BlockSpec((1, Dout), lambda l: (0, 0)),
        scratch_shapes=[pltpu.VMEM((N, D), jnp.float32)],
        compiler_params=pltpu.CompilerParams(
            dimension_semantics=("arbitrary",),
            vmem_limit_bytes=VMEM_LIMIT),
    )(node_features, params['attn_w'], params['attn_b'],
      params['node_in_w'], params['node_in_b'],
      params['node_in_ln_g'], params['node_in_ln_b'], cent,
      eb_sp,
      params['ln1_g'], params['ln1_b'],
      params['wqkv'], params['bqkv'], params['wo'], params['bo'],
      params['ln2_g'], params['ln2_b'],
      params['w1'], params['b1'], params['w2'], params['b2'],
      params['out_ln_g'], params['out_ln_b'], params['out_w'], params['out_b'],
      params['bn_g'], params['bn_b'], params['pool_w'], params['pool_b'])
    return out


# ----------------------------------------------------------------------------------
if __name__ == "__main__":
    # lane-dense demo config: node_dim / output_dim = 128, ff_dim = 256
    cfg = dict(num_layers=2, input_node_dim=20, node_dim=128, input_edge_dim=4,
               edge_dim=32, output_dim=128, n_heads=8, ff_dim=256,
               max_in_degree=99, max_out_degree=99, max_path_distance=1)

    key = jax.random.PRNGKey(0)
    kp, kx, ke, ka = jax.random.split(key, 4)
    params = init_params(kp, cfg)

    N, E = 16, 32
    x = jax.random.normal(kx, (N, cfg['input_node_dim']), jnp.float32)
    edge_index = jax.random.randint(ke, (2, E), 0, N)
    edge_attr = jax.random.normal(ka, (E, cfg['input_edge_dim']), jnp.float32)

    out = graphormer_forward(params, x, edge_index, edge_attr, cfg)
    out = jax.block_until_ready(out)
    assert out.shape == (1, cfg['output_dim'])
    assert bool(jnp.all(jnp.isfinite(out)))
    print("KERNEL_OK")
</pallas_src>

<mosaic_0001>
module attributes {stable_mosaic.version = 11 : i64} {
  func.func @edge_bias_kernel(%arg0: memref<32x4xf32, #tpu.memory_space<vmem>>, %arg1: memref<4x32xbf16, #tpu.memory_space<vmem>>, %arg2: memref<1x32xf32, #tpu.memory_space<vmem>>, %arg3: memref<1x32xf32, #tpu.memory_space<vmem>>, %arg4: memref<1x32xf32, #tpu.memory_space<vmem>>, %arg5: memref<32x16xbf16, #tpu.memory_space<vmem>>, %arg6: memref<32x16xf32, #tpu.memory_space<vmem>>) attributes {dimension_semantics = [], scalar_prefetch = 0 : i64, scratch_operands = 0 : i64, tpu.core_type = #tpu.core_type<tc>} {
    %c0 = arith.constant 0 : index
    %c0_0 = arith.constant 0 : index
    %0 = vector.load %arg0[%c0, %c0_0] : memref<32x4xf32, #tpu.memory_space<vmem>>, vector<32x4xf32>
    %1 = arith.truncf %0 : vector<32x4xf32> to vector<32x4xbf16>
    %c0_1 = arith.constant 0 : index
    %c0_2 = arith.constant 0 : index
    %2 = vector.load %arg1[%c0_1, %c0_2] : memref<4x32xbf16, #tpu.memory_space<vmem>>, vector<4x32xbf16>
    %cst = arith.constant dense<0.000000e+00> : vector<32x32xf32>
    %3 = tpu.matmul %1, %2, %cst {dimension_numbers = #tpu.dot_dimension_numbers<[1], [0], [0], [1], [0, 0, 1, 1], [], []>} : vector<32x4xbf16>, vector<4x32xbf16>, vector<32x32xf32> -> vector<32x32xf32>
    %c0_3 = arith.constant 0 : index
    %c0_4 = arith.constant 0 : index
    %4 = vector.load %arg2[%c0_3, %c0_4] : memref<1x32xf32, #tpu.memory_space<vmem>>, vector<1x32xf32>
    %5 = vector.broadcast %4 : vector<1x32xf32> to vector<32x32xf32>
    %6 = arith.addf %3, %5 : vector<32x32xf32>
    %c0_5 = arith.constant 0 : index
    %c0_6 = arith.constant 0 : index
    %7 = vector.load %arg3[%c0_5, %c0_6] : memref<1x32xf32, #tpu.memory_space<vmem>>, vector<1x32xf32>
    %c0_7 = arith.constant 0 : index
    %c0_8 = arith.constant 0 : index
    %8 = vector.load %arg4[%c0_7, %c0_8] : memref<1x32xf32, #tpu.memory_space<vmem>>, vector<1x32xf32>
    %cst_9 = arith.constant dense<0.000000e+00> : vector<32xf32>
    %9 = vector.multi_reduction <add>, %6, %cst_9 [1] : vector<32x32xf32> to vector<32xf32>
    %10 = vector.shape_cast %9 : vector<32xf32> to vector<32x1xf32>
    %cst_10 = arith.constant 3.200000e+01 : f32
    %11 = vector.broadcast %cst_10 : f32 to vector<32x1xf32>
    %12 = arith.divf %10, %11 : vector<32x1xf32>
    %13 = vector.broadcast %12 : vector<32x1xf32> to vector<32x32xf32>
    %14 = arith.subf %6, %13 : vector<32x32xf32>
    %15 = arith.mulf %14, %14 : vector<32x32xf32>
    %cst_11 = arith.constant dense<0.000000e+00> : vector<32xf32>
    %16 = vector.multi_reduction <add>, %15, %cst_11 [1] : vector<32x32xf32> to vector<32xf32>
    %17 = vector.shape_cast %16 : vector<32xf32> to vector<32x1xf32>
    %cst_12 = arith.constant 3.200000e+01 : f32
    %18 = vector.broadcast %cst_12 : f32 to vector<32x1xf32>
    %19 = arith.divf %17, %18 : vector<32x1xf32>
    %20 = vector.broadcast %12 : vector<32x1xf32> to vector<32x32xf32>
    %21 = arith.subf %6, %20 : vector<32x32xf32>
    %cst_13 = arith.constant 9.99999974E-6 : f32
    %22 = vector.broadcast %cst_13 : f32 to vector<32x1xf32>
    %23 = arith.addf %19, %22 : vector<32x1xf32>
    %24 = math.rsqrt %23 : vector<32x1xf32>
    %25 = vector.broadcast %24 : vector<32x1xf32> to vector<32x32xf32>
    %26 = arith.mulf %21, %25 : vector<32x32xf32>
    %27 = vector.broadcast %7 : vector<1x32xf32> to vector<32x32xf32>
    %28 = arith.mulf %26, %27 : vector<32x32xf32>
    %29 = vector.broadcast %8 : vector<1x32xf32> to vector<32x32xf32>
    %30 = arith.addf %28, %29 : vector<32x32xf32>
    %31 = arith.truncf %30 : vector<32x32xf32> to vector<32x32xbf16>
    %c0_14 = arith.constant 0 : index
    %c0_15 = arith.constant 0 : index
    %32 = vector.load %arg5[%c0_14, %c0_15] : memref<32x16xbf16, #tpu.memory_space<vmem>>, vector<32x16xbf16>
    %cst_16 = arith.constant dense<0.000000e+00> : vector<32x16xf32>
    %33 = tpu.matmul %31, %32, %cst_16 {dimension_numbers = #tpu.dot_dimension_numbers<[1], [0], [0], [1], [0, 0, 1, 1], [], []>} : vector<32x32xbf16>, vector<32x16xbf16>, vector<32x16xf32> -> vector<32x16xf32>
    %c0_17 = arith.constant 0 : index
    %c0_18 = arith.constant 0 : index
    %34 = vector.load %arg6[%c0_17, %c0_18] : memref<32x16xf32, #tpu.memory_space<vmem>>, vector<32x16xf32>
    tpu.vector_store %arg6[%c0_17, %c0_18], %33 {strides = array<i32>} : memref<32x16xf32, #tpu.memory_space<vmem>>, vector<32x16xf32>,
    return
  }
}

</mosaic_0001>

<llo_original>
// kernel: tpu_custom_call.1
$region0: #{tpu_custom_call.1}
  #allocation0 [shape = 'u32[]', space=smem, size = 0x4, offset = 0x4, fixed_abs, tag = 'smem constant byte address 0x4 - core index']
  #allocation1 [shape = 'u32[144,128]{1,0:T(1,128)}', space=vmem, size = 0x12000, scoped, tag = 'internal scratch']
  %s0 = inlined_call_operand.vmem [shape: f32[32,4], index: 0, kind: input, shape index: {}]
  %s1 = inlined_call_operand.vmem [shape: bf16[4,32], index: 1, kind: input, shape index: {}]
  %s2 = inlined_call_operand.vmem [shape: f32[1,32], index: 2, kind: input, shape index: {}]
  %s3 = inlined_call_operand.vmem [shape: f32[1,32], index: 3, kind: input, shape index: {}]
  %s4 = inlined_call_operand.vmem [shape: f32[1,32], index: 4, kind: input, shape index: {}]
  %s5 = inlined_call_operand.vmem [shape: bf16[32,16], index: 5, kind: input, shape index: {}]
  %s6 = inlined_call_operand.vmem [shape: f32[32,16], index: 6, kind: output, shape index: {}]
  %s7 = sld [smem:[#allocation0]]
  $region34: #{tpu_custom_call.1} parent=0
    _
  %s9 = ssub.s32 1, %s7
  %s10 = scalar_select 0, %s9, %s7
  // Predicated region
  $region2: #{tpu_custom_call.1} parent=0 // pred_check
    _
  $region3: #{tpu_custom_call.1} parent=0 // pred_check_branch
    %12 = sbr.rel (0) target = $region5
  $region4: #{tpu_custom_call.1} parent=0 // pred_region
    _
  $region5: #{tpu_custom_call.1} parent=0 // pred_fallthru
    _
  // Predicated region
  $region6: #{tpu_custom_call.1} parent=0 // pred_check
    _
  $region7: #{tpu_custom_call.1} parent=0 // pred_check_branch
    %14 = sbr.rel (0) target = $region9
  $region8: #{tpu_custom_call.1} parent=0 // pred_region
    _
  $region9: #{tpu_custom_call.1} parent=0 // pred_fallthru
    _
  // Predicated region
  $region10: #{tpu_custom_call.1} parent=0 // pred_check
    _
  $region11: #{tpu_custom_call.1} parent=0 // pred_check_branch
    %16 = sbr.rel (0) target = $region13
  $region12: #{tpu_custom_call.1} parent=0 // pred_region
    _
  $region13: #{tpu_custom_call.1} parent=0 // pred_fallthru
    _
  // Predicated region
  $region14: #{tpu_custom_call.1} parent=0 // pred_check
    _
  $region15: #{tpu_custom_call.1} parent=0 // pred_check_branch
    %18 = sbr.rel (0) target = $region17
  $region16: #{tpu_custom_call.1} parent=0 // pred_region
    _
  $region17: #{tpu_custom_call.1} parent=0 // pred_fallthru
    _
  // Predicated region
  $region18: #{tpu_custom_call.1} parent=0 // pred_check
    _
  $region19: #{tpu_custom_call.1} parent=0 // pred_check_branch
    %20 = sbr.rel (0) target = $region21
  $region20: #{tpu_custom_call.1} parent=0 // pred_region
    _
  $region21: #{tpu_custom_call.1} parent=0 // pred_fallthru
    _
  // Predicated region
  $region22: #{tpu_custom_call.1} parent=0 // pred_check
    _
  $region23: #{tpu_custom_call.1} parent=0 // pred_check_branch
    %22 = sbr.rel (0) target = $region25
  $region24: #{tpu_custom_call.1} parent=0 // pred_region
    _
  $region25: #{tpu_custom_call.1} parent=0 // pred_fallthru
    _
  %v24 = vld [vmem:[%s0] sm:$0xff]
  %v25 = vld [vmem:[%s0 + $0x8] sm:$0xff]
  %v26 = vld [vmem:[%s0 + $0x10] sm:$0xff]
  %v27 = vld [vmem:[%s0 + $0x18] sm:$0xff]
  %v28 = vpack.c.bf16 %v25, %v24
  %v29 = vpack.c.bf16 %v27, %v26
  %v30 = vld [vmem:[%s1] sm:$0x3]
  %v31 = vld [vmem:[%s2] sm:$0x1]
  %v33 = vlaneseq
  %v34 = vshrl.u32 %v33, 7
  %v35 = vsub.s32 0, %v34
  %v36 = vrot.slane %v31, %v35
  %vm38 = vcmask 31744
  %v40 = vsel %vm38, %v28, 0
  %v43 = vsel %vm38, %v29, 0
  %vm45 = vcmask 1041408
  %v47 = vsel %vm45, %v30, 0
  %49 = vmatprep.subr.bf16.mxu0 0
  %50 = vmatpush1.bf16.msra.mxu0 0
  %51 = vmatprep.subr.bf16.mxu0 0
  %52 = vmatpush1.bf16.msra.mxu0 0
  %53 = vmatprep.subr.bf16.mxu0 0
  %54 = vmatpush1.bf16.msra.mxu0 0
  %55 = vmatprep.subr.bf16.mxu0 0
  %56 = vmatpush1.bf16.msra.mxu0 0
  %57 = vmatprep.subr.bf16.mxu0 0
  %58 = vmatpush1.bf16.msra.mxu0 0
  %59 = vmatprep.subr.bf16.mxu0 0
  %60 = vmatpush1.bf16.msra.mxu0 0
  %61 = vmatprep.subr.bf16.mxu0 0
  %62 = vmatpush1.bf16.msra.mxu0 0
  %63 = vmatprep.subr.bf16.mxu0 0
  %64 = vmatpush1.bf16.msra.mxu0 %v47
  %65 = vmatprep.subr.bf16.mxu0 0
  %66 = vmatpush2.bf16.msra.mxu0 0
  %67 = vmatprep.subr.bf16.mxu0 0
  %68 = vmatpush2.bf16.msra.mxu0 0
  %69 = vmatprep.subr.bf16.mxu0 0
  %70 = vmatpush2.bf16.msra.mxu0 0
  %71 = vmatprep.subr.bf16.mxu0 0
  %72 = vmatpush2.bf16.msra.mxu0 0
  %73 = vmatprep.subr.bf16.mxu0 0
  %74 = vmatpush2.bf16.msra.mxu0 0
  %75 = vmatprep.subr.bf16.mxu0 0
  %76 = vmatpush2.bf16.msra.mxu0 0
  %77 = vmatprep.subr.bf16.mxu0 0
  %78 = vmatpush2.bf16.msra.mxu0 0
  %79 = vmatprep.subr.bf16.mxu0 0
  %80 = vmatpush2.bf16.msra.mxu0 0
  %81 = vmatprep.mubr.bf16.mxu0 0
  %82 = vmatmul.mubr.bf16.gmra.mxu0 %v40
  %v83 = vpop.f32.mrf.mxu0
  %v84 = vadd.f32 %v36, %v83
  %v85 = vpop.f32.mrf.mxu0
  %v86 = vpop.f32.mrf.mxu0
  %v87 = vadd.f32 %v36, %v86
  %v88 = vpop.f32.mrf.mxu0
  %89 = vmatprep.mubr.bf16.mxu0 0
  %90 = vmatmul.mubr.bf16.gmra.mxu0 %v43
  %v91 = vpop.f32.mrf.mxu0
  %v92 = vadd.f32 %v36, %v91
  %v93 = vpop.f32.mrf.mxu0
  %v94 = vpop.f32.mrf.mxu0
  %v95 = vadd.f32 %v36, %v94
  %v96 = vpop.f32.mrf.mxu0
  %97 = vdwg.mxu0
  %v98 = vld [vmem:[%s3] sm:$0x1]
  %v99 = vld [vmem:[%s4] sm:$0x1]
  %vm100 = vcmask 261120
  %v101 = vsel %vm100, %v84, 0.0
  %102 = vadd.xlane.f32.xlu0 %v101
  %v103 = vpop.xlane.xlu0 %102
  %v104 = vsel %vm100, %v87, 0.0
  %105 = vadd.xlane.f32.xlu0 %v104
  %v106 = vpop.xlane.xlu0 %105
  %v107 = vsel %vm100, %v92, 0.0
  %108 = vadd.xlane.f32.xlu0 %v107
  %v109 = vpop.xlane.xlu0 %108
  %v110 = vsel %vm100, %v95, 0.0
  %111 = vadd.xlane.f32.xlu0 %v110
  %v112 = vpop.xlane.xlu0 %111
  %v113 = vrcp.pop 32.0
  %v114 = vmul.f32 %v103, %v113
  %v115 = vmul.f32 %v106, %v113
  %v116 = vmul.f32 %v109, %v113
  %v117 = vmul.f32 %v112, %v113
  %v118 = vsub.f32 %v84, %v114
  %v119 = vsub.f32 %v87, %v115
  %v120 = vsub.f32 %v92, %v116
  %v121 = vsub.f32 %v95, %v117
  %v122 = vmul.f32 %v118, %v118
  %v123 = vmul.f32 %v119, %v119
  %v124 = vmul.f32 %v120, %v120
  %v125 = vmul.f32 %v121, %v121
  %v126 = vsel %vm100, %v122, 0.0
  %127 = vadd.xlane.f32.xlu0 %v126
  %v128 = vpop.xlane.xlu0 %127
  %v129 = vsel %vm100, %v123, 0.0
  %130 = vadd.xlane.f32.xlu0 %v129
  %v131 = vpop.xlane.xlu0 %130
  %v132 = vsel %vm100, %v124, 0.0
  %133 = vadd.xlane.f32.xlu0 %v132
  %v134 = vpop.xlane.xlu0 %133
  %v135 = vsel %vm100, %v125, 0.0
  %136 = vadd.xlane.f32.xlu0 %v135
  %v137 = vpop.xlane.xlu0 %136
  %v138 = vmul.f32 %v128, %v113
  %v139 = vmul.f32 %v131, %v113
  %v140 = vmul.f32 %v134, %v113
  %v141 = vmul.f32 %v137, %v113
  %v142 = vadd.f32 %v138, 1e-05
  %v143 = vadd.f32 %v139, 1e-05
  %v144 = vadd.f32 %v140, 1e-05
  %v145 = vadd.f32 %v141, 1e-05
  %v146 = vrsqrt.pop %v142
  %v147 = vrsqrt.pop %v143
  %v148 = vrsqrt.pop %v144
  %v149 = vrsqrt.pop %v145
  %v150 = vmul.f32 %v118, %v146
  %v151 = vmul.f32 %v119, %v147
  %v152 = vmul.f32 %v120, %v148
  %v153 = vmul.f32 %v121, %v149
  %v155 = vlaneseq
  %v156 = vshrl.u32 %v155, 7
  %v157 = vsub.s32 0, %v156
  %v158 = vrot.slane %v98, %v157
  %v160 = vmul.f32 %v150, %v158
  %v161 = vmul.f32 %v151, %v158
  %v162 = vmul.f32 %v152, %v158
  %v163 = vmul.f32 %v153, %v158
  %v165 = vlaneseq
  %v166 = vshrl.u32 %v165, 7
  %v167 = vsub.s32 0, %v166
  %v168 = vrot.slane %v99, %v167
  %v170 = vadd.f32 %v160, %v168
  %v171 = vadd.f32 %v161, %v168
  %v172 = vadd.f32 %v162, %v168
  %v173 = vadd.f32 %v163, %v168
  %v174 = vpack.c.bf16 %v171, %v170
  %v175 = vpack.c.bf16 %v173, %v172
  %v176 = vld [vmem:[%s5] sm:$0xf]
  %v177 = vld [vmem:[%s5 + $0x4] sm:$0xf]
  %v178 = vld [vmem:[%s5 + $0x8] sm:$0xf]
  %v179 = vld [vmem:[%s5 + $0xc] sm:$0xf]
  %v184 = vunpack.c.l.b16 %v176
  %v185 = vunpack.c.l.b16 %v177
  %v186 = vunpack.c.l.b16 %v178
  %v187 = vunpack.c.l.b16 %v179
  %v188 = vpack.c.b16 %v185, %v184
  %v189 = vpack.c.b16 %v187, %v186
  %v193 = vsel %vm100, %v174, 0
  %v196 = vsel %vm100, %v175, 0
  %198 = vmatprep.subr.bf16.mxu0 0
  %199 = vmatpush1.bf16.msra.mxu0 0
  %200 = vmatprep.subr.bf16.mxu0 0
  %201 = vmatpush1.bf16.msra.mxu0 0
  %202 = vmatprep.subr.bf16.mxu0 0
  %203 = vmatpush1.bf16.msra.mxu0 0
  %204 = vmatprep.subr.bf16.mxu0 0
  %205 = vmatpush1.bf16.msra.mxu0 0
  %206 = vmatprep.subr.bf16.mxu0 0
  %207 = vmatpush1.bf16.msra.mxu0 0
  %208 = vmatprep.subr.bf16.mxu0 0
  %209 = vmatpush1.bf16.msra.mxu0 0
  %210 = vmatprep.subr.bf16.mxu0 0
  %211 = vmatpush1.bf16.msra.mxu0 %v189
  %212 = vmatprep.subr.bf16.mxu0 0
  %213 = vmatpush1.bf16.msra.mxu0 %v188
  %214 = vmatprep.subr.bf16.mxu0 0
  %215 = vmatpush2.bf16.msra.mxu0 0
  %216 = vmatprep.subr.bf16.mxu0 0
  %217 = vmatpush2.bf16.msra.mxu0 0
  %218 = vmatprep.subr.bf16.mxu0 0
  %219 = vmatpush2.bf16.msra.mxu0 0
  %220 = vmatprep.subr.bf16.mxu0 0
  %221 = vmatpush2.bf16.msra.mxu0 0
  %222 = vmatprep.subr.bf16.mxu0 0
  %223 = vmatpush2.bf16.msra.mxu0 0
  %224 = vmatprep.subr.bf16.mxu0 0
  %225 = vmatpush2.bf16.msra.mxu0 0
  %226 = vmatprep.subr.bf16.mxu0 0
  %227 = vmatpush2.bf16.msra.mxu0 0
  %228 = vmatprep.subr.bf16.mxu0 0
  %229 = vmatpush2.bf16.msra.mxu0 0
  %230 = vmatprep.mubr.bf16.mxu0 0
  %231 = vmatmul.mubr.bf16.gmra.mxu0 %v193
  %v232 = vpop.f32.mrf.mxu0
  %v233 = vadd.f32 0.0, %v232
  %v234 = vpop.f32.mrf.mxu0
  %v235 = vpop.f32.mrf.mxu0
  %v236 = vadd.f32 0.0, %v235
  %v237 = vpop.f32.mrf.mxu0
  %238 = vmatprep.mubr.bf16.mxu0 0
  %239 = vmatmul.mubr.bf16.gmra.mxu0 %v196
  %v240 = vpop.f32.mrf.mxu0
  %v241 = vadd.f32 0.0, %v240
  %v242 = vpop.f32.mrf.mxu0
  %v243 = vpop.f32.mrf.mxu0
  %v244 = vadd.f32 0.0, %v243
  %v245 = vpop.f32.mrf.mxu0
  %246 = vdwg.mxu0
  %vm247 = vcmask 130048
  %248 = vst.msk [vmem:[%s6] sm:$0xff] %vm247, %v233
  %249 = vst.msk [vmem:[%s6 + $0x8] sm:$0xff] %vm247, %v236
  %250 = vst.msk [vmem:[%s6 + $0x10] sm:$0xff] %vm247, %v241
  %251 = vst.msk [vmem:[%s6 + $0x18] sm:$0xff] %vm247, %v244
  // Predicated region
  $region26: #{tpu_custom_call.1} parent=0 // pred_check
    _
  $region27: #{tpu_custom_call.1} parent=0 // pred_check_branch
    %253 = sbr.rel (0) target = $region29
  $region28: #{tpu_custom_call.1} parent=0 // pred_region
    _
  $region29: #{tpu_custom_call.1} parent=0 // pred_fallthru
    _
  // Predicated region
  $region30: #{tpu_custom_call.1} parent=0 // pred_check
    _
  $region31: #{tpu_custom_call.1} parent=0 // pred_check_branch
    %255 = sbr.rel (0) target = $region33
  $region32: #{tpu_custom_call.1} parent=0 // pred_region
    _
  $region33: #{tpu_custom_call.1} parent=0 // pred_fallthru
    _

</llo_original>
